<compile_context>
chip_gen: v7x
topology: tpu7x:2x2x1
jax: 0.10.0
libtpu: 0.0.40
codegen_flags: <defaults>
</compile_context>

<pallas_src>
import jax
import jax.numpy as jnp
from jax.experimental import pallas as pl
from jax.experimental.pallas import tpu as pltpu


def _round_up(x, m):
    return ((x + m - 1) // m) * m


def _linear_bias_kernel(x_ref, w_ref, b_ref, o_ref):
    """One (tm, tn) output tile; grid axis 2 is the K reduction.

    x_ref: (tm, tk)  compute dtype (bf16 by default)
    w_ref: (tk, tn)  compute dtype (pre-transposed W^T, padded)
    b_ref: (1,  tn)  float32 (padded bias)
    o_ref: (tm, tn)  float32 -- same block across k => used directly as accumulator.
    """
    k = pl.program_id(2)

    @pl.when(k == 0)
    def _init():
        # Initialize the resident output block with the bias instead of zeros:
        # removes the finalize add/copy entirely.
        o_ref[...] = jnp.broadcast_to(b_ref[...], o_ref.shape)

    o_ref[...] += jnp.dot(
        x_ref[...], w_ref[...], preferred_element_type=jnp.float32
    )


def prepare_feat_classifier_params(weight, bias, *, compute_dtype=jnp.bfloat16):
    """One-time (per model) preparation of the static classifier parameters.

    weight: (C, D) float32, bias: (C,) float32.
    Transposes to (D, C), zero-pads to tile multiples, casts to `compute_dtype`.
    Doing this once outside the per-step hot path removes a full extra
    read+write of the (C, D) weight from every forward call.
    """
    C, D = weight.shape
    # Lane-dense output tiling.  Prefer tn=128 when C is small so the class axis
    # still yields >= 2 parallel blocks (keeps both v7x TensorCores busy).
    tn = 128 if C <= 512 else 256
    tk = min(2048, _round_up(D, 128))
    Np = _round_up(C, tn)
    Kp = _round_up(D, tk)

    w_t = weight.T.astype(compute_dtype)                      # (D, C)
    if Kp != D or Np != C:
        w_t = jnp.pad(w_t, ((0, Kp - D), (0, Np - C)))
    b_p = bias if Np == C else jnp.pad(bias, (0, Np - C))
    b_p = b_p.astype(jnp.float32).reshape(1, Np)

    return {
        "w": w_t, "b": b_p, "C": C, "D": D, "Np": Np, "Kp": Kp,
        "tn": tn, "tk": tk, "compute_dtype": compute_dtype,
    }


def feat_classifier_forward_pallas(x, params):
    """x: (B, D) -> (B, C) float32, using prepared (padded/transposed) params."""
    B, D = x.shape
    assert D == params["D"], "x feature dim must match the classifier weight"

    compute_dtype = params["compute_dtype"]
    tn, tk = params["tn"], params["tk"]
    Np, Kp = params["Np"], params["Kp"]

    # Sublane granularity: 8 rows for f32, 16 for bf16 (packed sublanes).
    row_align = 16 if jnp.dtype(compute_dtype).itemsize < 4 else 8
    tm = min(256, _round_up(B, row_align))
    Mp = _round_up(B, tm)

    x_c = x.astype(compute_dtype)
    if Mp != B or Kp != D:
        x_c = jnp.pad(x_c, ((0, Mp - B), (0, Kp - D)))

    grid = (Mp // tm, Np // tn, Kp // tk)

    in_bytes = jnp.dtype(compute_dtype).itemsize
    cost = pl.CostEstimate(
        flops=2 * Mp * Np * Kp,
        transcendentals=0,
        bytes_accessed=in_bytes * (Mp * Kp + Kp * Np) + 4 * (Mp * Np + Np),
    )

    out_padded = pl.pallas_call(
        _linear_bias_kernel,
        out_shape=jax.ShapeDtypeStruct((Mp, Np), jnp.float32),
        grid_spec=pltpu.PrefetchScalarGridSpec(
            num_scalar_prefetch=0,
            grid=grid,
            in_specs=[
                pl.BlockSpec((tm, tk), lambda i, j, k: (i, k)),   # x tile
                pl.BlockSpec((tk, tn), lambda i, j, k: (k, j)),   # W^T tile
                pl.BlockSpec((1, tn), lambda i, j, k: (0, j)),    # bias tile
            ],
            out_specs=pl.BlockSpec((tm, tn), lambda i, j, k: (i, j)),
        ),
        compiler_params=pltpu.CompilerParams(
            # Batch / class axes are independent (megacore-shardable); the K
            # reduction is last and "arbitrary" (output block resident across it).
            dimension_semantics=("parallel", "parallel", "arbitrary"),
        ),
        cost_estimate=cost,
    )(x_c, params["w"], params["b"])

    return out_padded[:B, : params["C"]]


def feat_classifier_forward(x, weight, bias, *, compute_dtype=jnp.bfloat16,
                            force_pallas=False):
    """nn.Linear-style forward: x @ W.T + b.

    For tiny problems the pad-to-(16,128) + output-slice traffic dominates, so we
    fall back to plain XLA dot unless `force_pallas=True`.
    """
    B, D = x.shape
    C = weight.shape[0]
    if not force_pallas and (B * C * D) < (1 << 21):   # ~2M MACs threshold
        return x @ weight.T + bias
    params = prepare_feat_classifier_params(weight, bias, compute_dtype=compute_dtype)
    return feat_classifier_forward_pallas(x, params)


def init_feat_classifier_params(key, class_num, bottleneck_dim=256):
    """Deterministic init mirroring init_weights for nn.Linear:
       xavier_normal_ on weight, zeros on bias."""
    std = (2.0 / (class_num + bottleneck_dim)) ** 0.5  # xavier normal, gain=1
    w = std * jax.random.normal(key, (class_num, bottleneck_dim), dtype=jnp.float32)
    b = jnp.zeros((class_num,), dtype=jnp.float32)
    return w, b


def _check(x, weight, bias, out):
    # Exact-math reference with the same bf16-cast inputs + f32 accumulation.
    ref_bf16 = (x.astype(jnp.bfloat16).astype(jnp.float32)
                @ weight.astype(jnp.bfloat16).astype(jnp.float32).T) + bias
    assert out.shape == ref_bf16.shape
    assert jnp.allclose(out, ref_bf16, atol=1e-4, rtol=1e-4), "bf16-path mismatch"
    # Sanity vs. the full-f32 nn.Linear reference (bf16 streaming tolerance).
    ref_f32 = x @ weight.T + bias
    assert jnp.allclose(out, ref_f32, atol=5e-2, rtol=5e-2), "f32 sanity mismatch"


if __name__ == "__main__":
    key = jax.random.PRNGKey(0)
    kx1, kw1, kx2, kw2 = jax.random.split(key, 4)

    # --- case 1: the module's default-ish small shape (B=8, C=16, D=256) ------
    class_num, bottleneck_dim, batch = 16, 256, 8
    x1 = jax.random.normal(kx1, (batch, bottleneck_dim), dtype=jnp.float32)
    w1, b1 = init_feat_classifier_params(kw1, class_num, bottleneck_dim)

    params1 = prepare_feat_classifier_params(w1, b1)            # one-time prep
    out1 = feat_classifier_forward_pallas(x1, params1)          # Pallas kernel
    out1 = jax.block_until_ready(out1)
    _check(x1, w1, b1, out1)

    # --- case 2: non-aligned C, multiple class-axis blocks ---------------------
    class_num2, batch2 = 200, 40
    x2 = jax.random.normal(kx2, (batch2, bottleneck_dim), dtype=jnp.float32)
    w2, b2 = init_feat_classifier_params(kw2, class_num2, bottleneck_dim)

    out2 = feat_classifier_forward(x2, w2, b2, force_pallas=True)
    out2 = jax.block_until_ready(out2)
    _check(x2, w2, b2, out2)

    print("KERNEL_OK")
</pallas_src>

<mosaic_0001>
module attributes {stable_mosaic.version = 11 : i64} {
  func.func @_linear_bias_kernel(%arg0: i32, %arg1: i32, %arg2: i32, %arg3: memref<16x256xbf16, #tpu.memory_space<vmem>>, %arg4: memref<256x128xbf16, #tpu.memory_space<vmem>>, %arg5: memref<1x128xf32, #tpu.memory_space<vmem>>, %arg6: memref<16x128xf32, #tpu.memory_space<vmem>>) attributes {dimension_semantics = [#tpu.dimension_semantics<parallel>, #tpu.dimension_semantics<parallel>, #tpu.dimension_semantics<arbitrary>], iteration_bounds = array<i64: 1, 1, 1>, scalar_prefetch = 0 : i64, scratch_operands = 0 : i64, tpu.core_type = #tpu.core_type<tc>, window_params = [{transform_indices = @transform_0, window_bounds = array<i64: 16, 256>}, {transform_indices = @transform_1, window_bounds = array<i64: 256, 128>}, {transform_indices = @transform_2, window_bounds = array<i64: 1, 128>}, {transform_indices = @transform_3, window_bounds = array<i64: 16, 128>}]} {
    %c0_i32 = arith.constant 0 : i32
    %0 = arith.cmpi eq, %arg2, %c0_i32 : i32
    %1 = arith.extui %0 : i1 to i32
    %c0_i32_0 = arith.constant 0 : i32
    %2 = arith.cmpi ne, %1, %c0_i32_0 : i32
    scf.if %2 {
      %c0_8 = arith.constant 0 : index
      %c0_9 = arith.constant 0 : index
      %9 = vector.load %arg5[%c0_8, %c0_9] : memref<1x128xf32, #tpu.memory_space<vmem>>, vector<1x128xf32>
      %10 = vector.shape_cast %9 : vector<1x128xf32> to vector<1x128xf32>
      %11 = vector.broadcast %10 : vector<1x128xf32> to vector<16x128xf32>
      %c0_10 = arith.constant 0 : index
      %c0_11 = arith.constant 0 : index
      %12 = vector.load %arg6[%c0_10, %c0_11] : memref<16x128xf32, #tpu.memory_space<vmem>>, vector<16x128xf32>
      tpu.vector_store %arg6[%c0_10, %c0_11], %11 {strides = array<i32>} : memref<16x128xf32, #tpu.memory_space<vmem>>, vector<16x128xf32>,
    } else {
    }
    %c0 = arith.constant 0 : index
    %c0_1 = arith.constant 0 : index
    %3 = vector.load %arg6[%c0, %c0_1] : memref<16x128xf32, #tpu.memory_space<vmem>>, vector<16x128xf32>
    %c0_2 = arith.constant 0 : index
    %c0_3 = arith.constant 0 : index
    %4 = vector.load %arg3[%c0_2, %c0_3] : memref<16x256xbf16, #tpu.memory_space<vmem>>, vector<16x256xbf16>
    %c0_4 = arith.constant 0 : index
    %c0_5 = arith.constant 0 : index
    %5 = vector.load %arg4[%c0_4, %c0_5] : memref<256x128xbf16, #tpu.memory_space<vmem>>, vector<256x128xbf16>
    %cst = arith.constant dense<0.000000e+00> : vector<16x128xf32>
    %6 = tpu.matmul %4, %5, %cst {dimension_numbers = #tpu.dot_dimension_numbers<[1], [0], [0], [1], [0, 0, 1, 1], [], []>} : vector<16x256xbf16>, vector<256x128xbf16>, vector<16x128xf32> -> vector<16x128xf32>
    %7 = arith.addf %3, %6 : vector<16x128xf32>
    %c0_6 = arith.constant 0 : index
    %c0_7 = arith.constant 0 : index
    %8 = vector.load %arg6[%c0_6, %c0_7] : memref<16x128xf32, #tpu.memory_space<vmem>>, vector<16x128xf32>
    tpu.vector_store %arg6[%c0_6, %c0_7], %7 {strides = array<i32>} : memref<16x128xf32, #tpu.memory_space<vmem>>, vector<16x128xf32>,
    return
  }
  func.func @transform_0(%arg0: i32, %arg1: i32, %arg2: i32) -> (i32, i32) {
    %c0_i32 = arith.constant 0 : i32
    return %arg0, %arg2 : i32, i32
  }
  func.func @transform_1(%arg0: i32, %arg1: i32, %arg2: i32) -> (i32, i32) {
    %c0_i32 = arith.constant 0 : i32
    return %arg2, %arg1 : i32, i32
  }
  func.func @transform_2(%arg0: i32, %arg1: i32, %arg2: i32) -> (i32, i32) {
    %c0_i32 = arith.constant 0 : i32
    %c0_i32_0 = arith.constant 0 : i32
    return %c0_i32, %arg1 : i32, i32
  }
  func.func @transform_3(%arg0: i32, %arg1: i32, %arg2: i32) -> (i32, i32) {
    %c0_i32 = arith.constant 0 : i32
    return %arg0, %arg1 : i32, i32
  }
}

</mosaic_0001>

<llo_original>
// kernel: tpu_custom_call.1
$region0: #{tpu_custom_call.1}
  #allocation0 [shape = 'u32[]', space=smem, size = 0x4, offset = 0x4, fixed_abs, tag = 'smem constant byte address 0x4 - core index']
  #allocation1 [shape = 'u32[144,128]{1,0:T(1,128)}', space=vmem, size = 0x12000, scoped, tag = 'internal scratch']
  %s0 = inlined_call_operand.hbm [shape: bf16[16,256], index: 0, kind: input, shape index: {}]
  %s1 = inlined_call_operand.hbm [shape: bf16[256,128], index: 1, kind: input, shape index: {}]
  %s2 = inlined_call_operand.vmem [shape: f32[1,128], index: 2, kind: input, shape index: {}]
  %s3 = inlined_call_operand.hbm [shape: f32[16,128], index: 3, kind: output, shape index: {}]
  %s4 = sld [smem:[#allocation0]]
  $region34: #{tpu_custom_call.1} parent=0
    _
  %s6 = ssub.s32 1, %s4
  %s7 = scalar_select 0, %s6, %s4
  $region1: #{tpu_custom_call.1} parent=0
    #allocation2 [shape = 'u8[8192]{0}', space=vmem, size = 0x2000, scoped, tag = 'input window, operand 0, single buffered']
    #allocation3 [shape = 's32[1]{0}', space=sflag, size = 0x4, scoped, tag = 'scoped memory for tpu_custom_call.1']
    #allocation4 [shape = 's32[1]{0}', space=sflag, size = 0x4, scoped, tag = 'scoped memory for tpu_custom_call.1']
    #allocation5 [shape = 'u8[65536]{0}', space=vmem, size = 0x10000, scoped, tag = 'input window, operand 1, single buffered']
    #allocation6 [shape = 's32[1]{0}', space=sflag, size = 0x4, scoped, tag = 'scoped memory for tpu_custom_call.1']
    #allocation7 [shape = 'u8[8192]{0}', space=vmem, size = 0x2000, scoped, tag = 'output window, operand 0, single buffered']
    %8 = vsyncpa [#allocation3], 0
    %9 = vsyncpa [#allocation6], 0
    %10 = vsyncpa [#allocation4], 0
    // Predicated region
    $region2: #{tpu_custom_call.1} parent=1 // pred_check
      _
    $region3: #{tpu_custom_call.1} parent=1 // pred_check_branch
      %12 = sbr.rel (0) target = $region5
    $region4: #{tpu_custom_call.1} parent=1 // pred_region
      %s14 = ssub.s32 256, 256
      %15 = vsyncadd [#allocation3], %s14
      %s16 = sshll.u32 [#allocation2], 4
      %s17 = int_to_ptr.vmem [resolvable:$true] %s16
      %22 = dma.hbm_to_vmem [thread:$0]  %s0, 256, %s17, [#allocation3], 128, 128, 8
    $region5: #{tpu_custom_call.1} parent=1 // pred_fallthru
      _
    // Predicated region
    $region6: #{tpu_custom_call.1} parent=1 // pred_check
      _
    $region7: #{tpu_custom_call.1} parent=1 // pred_check_branch
      %24 = sbr.rel (0) target = $region9
    $region8: #{tpu_custom_call.1} parent=1 // pred_region
      %s26 = ssub.s32 2048, 2048
      %27 = vsyncadd [#allocation6], %s26
      %s28 = sshll.u32 [#allocation5], 4
      %s29 = int_to_ptr.vmem [resolvable:$true] %s28
      %34 = dma.hbm_to_vmem [thread:$0]  %s1, 2048, %s29, [#allocation6], 64, 64, 4
    $region9: #{tpu_custom_call.1} parent=1 // pred_fallthru
      _
    // Predicated region
    $region10: #{tpu_custom_call.1} parent=1 // pred_check
      _
    $region11: #{tpu_custom_call.1} parent=1 // pred_check_branch
      %36 = sbr.rel (0) target = $region13
    $region12: #{tpu_custom_call.1} parent=1 // pred_region
      _
    $region13: #{tpu_custom_call.1} parent=1 // pred_fallthru
      _
    // Predicated region
    $region14: #{tpu_custom_call.1} parent=1 // pred_check
      _
    $region15: #{tpu_custom_call.1} parent=1 // pred_check_branch
      %38 = sbr.rel (0) target = $region17
    $region16: #{tpu_custom_call.1} parent=1 // pred_region
      %39 = dma.done [#allocation3], 256
    $region17: #{tpu_custom_call.1} parent=1 // pred_fallthru
      _
    // Predicated region
    $region18: #{tpu_custom_call.1} parent=1 // pred_check
      _
    $region19: #{tpu_custom_call.1} parent=1 // pred_check_branch
      %41 = sbr.rel (0) target = $region21
    $region20: #{tpu_custom_call.1} parent=1 // pred_region
      %42 = dma.done [#allocation6], 2048
    $region21: #{tpu_custom_call.1} parent=1 // pred_fallthru
      _
    %p44 = scmp.eq.s32.totalorder 0, 0
    // Predicated region
    $region22: #{tpu_custom_call.1} parent=1 // pred_check
      %p45 = pneg %p44
    $region23: #{tpu_custom_call.1} parent=1 // pred_check_branch
      %47 = sbr.rel (%p45) target = $region25
    $region24: #{tpu_custom_call.1} parent=1 // pred_region
      %v48 = vld [vmem:[%s2] sm:$0x1]
      %v50 = vlaneseq
      %v51 = vshrl.u32 %v50, 7
      %v52 = vsub.s32 0, %v51
      %v53 = vrot.slane %v48, %v52
      %55 = vst [vmem:[#allocation7] sm:$0xff] %v53
      %56 = vst [vmem:[#allocation7 + $0x8] sm:$0xff] %v53
    $region25: #{tpu_custom_call.1} parent=1 // pred_fallthru
      _
    %v57 = vld [vmem:[#allocation7] sm:$0xff]
    %v58 = vld [vmem:[#allocation7 + $0x8] sm:$0xff]
    %v59 = vld [vmem:[#allocation2] sm:$0xff]
    %v60 = vld [vmem:[#allocation2 + $0x8] sm:$0xff]
    %v61 = vld [vmem:[#allocation5] sm:$0xf]
    %v62 = vld [vmem:[#allocation5 + $0x4] sm:$0xf]
    %v63 = vld [vmem:[#allocation5 + $0x8] sm:$0xf]
    %v64 = vld [vmem:[#allocation5 + $0xc] sm:$0xf]
    %v65 = vld [vmem:[#allocation5 + $0x10] sm:$0xf]
    %v66 = vld [vmem:[#allocation5 + $0x14] sm:$0xf]
    %v67 = vld [vmem:[#allocation5 + $0x18] sm:$0xf]
    %v68 = vld [vmem:[#allocation5 + $0x1c] sm:$0xf]
    %v69 = vld [vmem:[#allocation5 + $0x20] sm:$0xf]
    %v70 = vld [vmem:[#allocation5 + $0x24] sm:$0xf]
    %v71 = vld [vmem:[#allocation5 + $0x28] sm:$0xf]
    %v72 = vld [vmem:[#allocation5 + $0x2c] sm:$0xf]
    %v73 = vld [vmem:[#allocation5 + $0x30] sm:$0xf]
    %v74 = vld [vmem:[#allocation5 + $0x34] sm:$0xf]
    %v75 = vld [vmem:[#allocation5 + $0x38] sm:$0xf]
    %v76 = vld [vmem:[#allocation5 + $0x3c] sm:$0xf]
    %v77 = vld [vmem:[#allocation5 + $0x40] sm:$0xf]
    %v78 = vld [vmem:[#allocation5 + $0x44] sm:$0xf]
    %v79 = vld [vmem:[#allocation5 + $0x48] sm:$0xf]
    %v80 = vld [vmem:[#allocation5 + $0x4c] sm:$0xf]
    %v81 = vld [vmem:[#allocation5 + $0x50] sm:$0xf]
    %v82 = vld [vmem:[#allocation5 + $0x54] sm:$0xf]
    %v83 = vld [vmem:[#allocation5 + $0x58] sm:$0xf]
    %v84 = vld [vmem:[#allocation5 + $0x5c] sm:$0xf]
    %v85 = vld [vmem:[#allocation5 + $0x60] sm:$0xf]
    %v86 = vld [vmem:[#allocation5 + $0x64] sm:$0xf]
    %v87 = vld [vmem:[#allocation5 + $0x68] sm:$0xf]
    %v88 = vld [vmem:[#allocation5 + $0x6c] sm:$0xf]
    %v89 = vld [vmem:[#allocation5 + $0x70] sm:$0xf]
    %v90 = vld [vmem:[#allocation5 + $0x74] sm:$0xf]
    %v91 = vld [vmem:[#allocation5 + $0x78] sm:$0xf]
    %v92 = vld [vmem:[#allocation5 + $0x7c] sm:$0xf]
    %v95 = vunpack.c.l.b16 %v59
    %v96 = vunpack.c.h.b16 %v59
    %v97 = vunpack.c.l.b16 %v60
    %v98 = vunpack.c.h.b16 %v60
    %v99 = vpack.c.b16 %v97, %v95
    %v100 = vpack.c.b16 %v98, %v96
    %v135 = vunpack.c.l.b16 %v61
    %v136 = vunpack.c.l.b16 %v62
    %v137 = vunpack.c.l.b16 %v63
    %v138 = vunpack.c.l.b16 %v64
    %v139 = vunpack.c.l.b16 %v65
    %v140 = vunpack.c.l.b16 %v66
    %v141 = vunpack.c.l.b16 %v67
    %v142 = vunpack.c.l.b16 %v68
    %v143 = vunpack.c.l.b16 %v69
    %v144 = vunpack.c.l.b16 %v70
    %v145 = vunpack.c.l.b16 %v71
    %v146 = vunpack.c.l.b16 %v72
    %v147 = vunpack.c.l.b16 %v73
    %v148 = vunpack.c.l.b16 %v74
    %v149 = vunpack.c.l.b16 %v75
    %v150 = vunpack.c.l.b16 %v76
    %v151 = vunpack.c.l.b16 %v77
    %v152 = vunpack.c.l.b16 %v78
    %v153 = vunpack.c.l.b16 %v79
    %v154 = vunpack.c.l.b16 %v80
    %v155 = vunpack.c.l.b16 %v81
    %v156 = vunpack.c.l.b16 %v82
    %v157 = vunpack.c.l.b16 %v83
    %v158 = vunpack.c.l.b16 %v84
    %v159 = vunpack.c.l.b16 %v85
    %v160 = vunpack.c.l.b16 %v86
    %v161 = vunpack.c.l.b16 %v87
    %v162 = vunpack.c.l.b16 %v88
    %v163 = vunpack.c.l.b16 %v89
    %v164 = vunpack.c.l.b16 %v90
    %v165 = vunpack.c.l.b16 %v91
    %v166 = vunpack.c.l.b16 %v92
    %v167 = vpack.c.b16 %v136, %v135
    %v168 = vpack.c.b16 %v138, %v137
    %v169 = vpack.c.b16 %v140, %v139
    %v170 = vpack.c.b16 %v142, %v141
    %v171 = vpack.c.b16 %v144, %v143
    %v172 = vpack.c.b16 %v146, %v145
    %v173 = vpack.c.b16 %v148, %v147
    %v174 = vpack.c.b16 %v150, %v149
    %v175 = vpack.c.b16 %v152, %v151
    %v176 = vpack.c.b16 %v154, %v153
    %v177 = vpack.c.b16 %v156, %v155
    %v178 = vpack.c.b16 %v158, %v157
    %v179 = vpack.c.b16 %v160, %v159
    %v180 = vpack.c.b16 %v162, %v161
    %v181 = vpack.c.b16 %v164, %v163
    %v182 = vpack.c.b16 %v166, %v165
    %199 = vmatprep.subr.bf16.mxu0 0
    %200 = vmatpush1.bf16.msra.mxu0 %v167
    %201 = vmatprep.subr.bf16.mxu0 0
    %202 = vmatpush1.bf16.msra.mxu0 %v168
    %203 = vmatprep.subr.bf16.mxu0 0
    %204 = vmatpush1.bf16.msra.mxu0 %v169
    %205 = vmatprep.subr.bf16.mxu0 0
    %206 = vmatpush1.bf16.msra.mxu0 %v170
    %207 = vmatprep.subr.bf16.mxu0 0
    %208 = vmatpush1.bf16.msra.mxu0 %v171
    %209 = vmatprep.subr.bf16.mxu0 0
    %210 = vmatpush1.bf16.msra.mxu0 %v172
    %211 = vmatprep.subr.bf16.mxu0 0
    %212 = vmatpush1.bf16.msra.mxu0 %v173
    %213 = vmatprep.subr.bf16.mxu0 0
    %214 = vmatpush1.bf16.msra.mxu0 %v174
    %215 = vmatprep.subr.bf16.mxu0 0
    %216 = vmatpush1.bf16.msra.mxu0 %v175
    %217 = vmatprep.subr.bf16.mxu0 0
    %218 = vmatpush1.bf16.msra.mxu0 %v176
    %219 = vmatprep.subr.bf16.mxu0 0
    %220 = vmatpush1.bf16.msra.mxu0 %v177
    %221 = vmatprep.subr.bf16.mxu0 0
    %222 = vmatpush1.bf16.msra.mxu0 %v178
    %223 = vmatprep.subr.bf16.mxu0 0
    %224 = vmatpush1.bf16.msra.mxu0 %v179
    %225 = vmatprep.subr.bf16.mxu0 0
    %226 = vmatpush1.bf16.msra.mxu0 %v180
    %227 = vmatprep.subr.bf16.mxu0 0
    %228 = vmatpush1.bf16.msra.mxu0 %v181
    %229 = vmatprep.subr.bf16.mxu0 0
    %230 = vmatpush1.bf16.msra.mxu0 %v182
    %231 = vmatprep.mubr.bf16.mxu0 %v100
    %232 = vmatmul.mubr.bf16.gmra.mrb[0].mxu0 %v99
    %v233 = vpop.f32.mrb[0].mxu0
    %v234 = vadd.f32 0.0, %v233
    %v235 = vpop.f32.mrb[0].mxu0
    %v236 = vpop.f32.mrb[0].mxu0
    %v237 = vadd.f32 0.0, %v236
    %v238 = vpop.f32.mrb[0].mxu0
    %239 = vdwg.mxu0
    %v240 = vadd.f32 %v57, %v234
    %v241 = vadd.f32 %v58, %v237
    %242 = vst [vmem:[#allocation7] sm:$0xff] %v240
    %243 = vst [vmem:[#allocation7 + $0x8] sm:$0xff] %v241
    // Predicated region
    $region26: #{tpu_custom_call.1} parent=1 // pred_check
      _
    $region27: #{tpu_custom_call.1} parent=1 // pred_check_branch
      %245 = sbr.rel (0) target = $region29
    $region28: #{tpu_custom_call.1} parent=1 // pred_region
      %s247 = ssub.s32 256, 256
      %248 = vsyncadd [#allocation4], %s247
      %s249 = sshll.u32 [#allocation7], 4
      %s250 = int_to_ptr.vmem [resolvable:$true] %s249
      %255 = dma.vmem_to_hbm [thread:$0]  %s250, 256, %s3, [#allocation4], 128, 128, 8
    $region29: #{tpu_custom_call.1} parent=1 // pred_fallthru
      _
    // Predicated region
    $region30: #{tpu_custom_call.1} parent=1 // pred_check
      _
    $region31: #{tpu_custom_call.1} parent=1 // pred_check_branch
      %257 = sbr.rel (0) target = $region33
    $region32: #{tpu_custom_call.1} parent=1 // pred_region
      %258 = dma.done [#allocation4], 256
    $region33: #{tpu_custom_call.1} parent=1 // pred_fallthru
      _
    %259 = vsyncpa [#allocation3], 1
    %260 = vsyncpa [#allocation6], 1
    %261 = vsyncpa [#allocation4], 1

</llo_original>
